<compile_context>
chip_gen: v7x
topology: tpu7x:2x2x1
jax: 0.10.0
libtpu: 0.0.40
codegen_flags: <defaults>
</compile_context>

<pallas_src>
import functools

import jax
import jax.numpy as jnp
from jax import lax
from jax.experimental import pallas as pl
from jax.experimental.pallas import tpu as pltpu


def _caps_kernel(x_ref, w_ref, out_ref, im2col_ref, *, K, W, Cin):
    # x_ref      : (Cin, N)   input, channel-major, batch+spatial flattened on lanes
    # w_ref      : (Cout, Kc) fused tap weights; column K*K*Cin is the fused bias,
    #                         remaining columns are zero pad (sublane alignment)
    # out_ref    : (Cout, N)  conv output on the full HxW grid (valid window sliced outside)
    # im2col_ref : (Kc, N)    VMEM scratch: K*K shifted tap slabs + ones row + zero pad
    x = x_ref[...]
    N = x.shape[-1]
    KKC = K * K * Cin

    # im2col: stack the K*K lane-shifted taps on the contraction (sublane) axis.
    # Rolls run on the XLU slot; each slab store is sublane-aligned (Cin multiple of 8 here).
    for kh in range(K):
        for kw in range(K):
            off = kh * W + kw
            rolled = x if off == 0 else pltpu.roll(x, shift=(-off) % N, axis=1)
            im2col_ref[pl.ds((kh * K + kw) * Cin, Cin), :] = rolled

    # Bias row (ones) + zero pad rows, written as one slab so the padded contraction rows
    # are never read uninitialized.
    tail_rows = im2col_ref.shape[0] - KKC
    row_id = lax.broadcasted_iota(jnp.int32, (tail_rows, N), 0)
    im2col_ref[pl.ds(KKC, tail_rows), :] = jnp.where(
        row_id == 0, 1.0, 0.0).astype(jnp.float32)

    # Single deep contraction (depth Kc); bias already folded in -> epilogue is just the store.
    out_ref[...] = jnp.dot(w_ref[...], im2col_ref[...],
                           preferred_element_type=jnp.float32).astype(out_ref.dtype)


def _num_tensorcores():
    """Best-effort TensorCore count (1 on v5e/v6e, 2 on v7x); conservative fallback = 1."""
    try:
        info = pltpu.get_tpu_info()
    except Exception:
        return 1
    for name in ("num_tensorcores", "tensorcore_count", "num_cores",
                 "cores_per_chip", "num_available_cores"):
        v = getattr(info, name, None)
        if isinstance(v, int) and v > 0:
            return v
    return 1


def _choose_lane_steps(B, Sp, Cin, Cout, Kc, n_cores):
    """Grid steps along the flattened (batch, spatial) lane axis.

    Constraints: each step covers whole images (so roll-wrap only hits discarded columns)
    and per-step width is a multiple of 128 lanes (or the full axis). One wide step unless
    the VMEM budget forces tiling, or >=2 TensorCores can each keep >=1024 lanes.
    """
    L = B * Sp
    # double-buffered in/out blocks + single im2col scratch, f32
    bytes_per_lane = 4 * (2 * Cin + 2 * Cout + Kc)
    budget = 16 << 20          # conservative: fits the default scoped-VMEM limit on all chips
    max_lanes = max(512, (budget // bytes_per_lane) // 128 * 128)

    cands = [s for s in range(1, B + 1)
             if B % s == 0 and (s == 1 or ((B // s) * Sp) % 128 == 0)]
    steps = next((s for s in cands if (L // s) <= max_lanes), cands[-1])
    # Megacore split only when both halves stay wide enough to dwarf per-step overhead.
    if steps == 1 and n_cores >= 2 and 2 in cands and (L // 2) >= 1024:
        steps = 2
    return steps


def fuse_capsule_params(params, *, ch_in, n_in, ch_out, n_out, K):
    """Trace-time algebra, hoisted out of the per-forward path (call once at param load).

    Composes conv_vector into conv_channel's taps, folds the capsule permute AND the final
    (n_out, ch_out)->(ch_out, n_out) output permute into row/column order, and folds the
    fused bias in as an extra weight column (matched by a ones row in the im2col scratch).
    """
    wv, bv, wc, bc = params
    Cin = ch_in * n_in
    Cout = ch_out * n_out          # rows ordered (c, j) -> c*n_out + j

    wv_r = wv.reshape(ch_in, n_out, n_in).astype(jnp.float32)           # [g, j, i]
    bv_r = bv.reshape(ch_in, n_out).astype(jnp.float32)                 # [g, j]
    wc_r = wc.reshape(n_out, ch_out, ch_in, K, K).astype(jnp.float32)   # [j, c, g, kh, kw]
    bc_r = bc.reshape(n_out, ch_out).astype(jnp.float32)                # [j, c]

    # Wf[kh, kw, c*n_out+j, g*n_in+i] = wc[j*ch_out+c, g, kh, kw] * wv[g*n_out+j, i]
    wf = jnp.einsum('jcgkl,gji->klcjgi', wc_r, wv_r).reshape(K, K, Cout, Cin)
    # columns ordered (kh, kw, cin) to match the im2col scratch row layout
    w_row = wf.transpose(2, 0, 1, 3).reshape(Cout, K * K * Cin)
    # fused bias: (sum over taps of Wc @ bv) + bc, ch_out-major row order
    bf = (jnp.einsum('jcgkl,gj->cj', wc_r, bv_r) + bc_r.T).reshape(Cout, 1)

    pad = (-(K * K * Cin + 1)) % 8          # pad contraction depth to a sublane multiple
    w_full = jnp.concatenate([w_row, bf, jnp.zeros((Cout, pad), jnp.float32)], axis=1)
    return w_full                            # (Cout, K*K*Cin + 1 + pad)


@functools.partial(jax.jit, static_argnames=("ch_in", "n_in", "ch_out", "n_out", "K"))
def capsules_forward(x, w_full, *, ch_in, n_in, ch_out, n_out, K):
    """x: (B, ch_in*n_in, H, W) NCHW; w_full from fuse_capsule_params."""
    B, C, H, Wd = x.shape
    Cin = ch_in * n_in
    Cout = ch_out * n_out
    assert C == Cin
    # Guard for the roll-wrap invariant (valid output position p + kh*W + kw < H*W), which
    # only holds for stride=1, padding=0, dilation=1 — the only configuration implemented.
    assert 1 <= K <= H and K <= Wd, "kernel supports the module defaults only"
    Ho, Wo = H - (K - 1), Wd - (K - 1)
    Sp = H * Wd
    Kc = w_full.shape[1]

    # NCHW -> (Cin, B*Sp): batch folded onto the lane axis for wide, lane-dense matmuls.
    xk = x.reshape(B, Cin, Sp).transpose(1, 0, 2).reshape(Cin, B * Sp)

    steps = _choose_lane_steps(B, Sp, Cin, Cout, Kc, _num_tensorcores())
    Ns = (B // steps) * Sp

    kernel = functools.partial(_caps_kernel, K=K, W=Wd, Cin=Cin)
    out = pl.pallas_call(
        kernel,
        out_shape=jax.ShapeDtypeStruct((Cout, B * Sp), x.dtype),
        grid_spec=pltpu.PrefetchScalarGridSpec(
            num_scalar_prefetch=0,
            grid=(steps,),
            in_specs=[
                pl.BlockSpec((Cin, Ns), lambda g: (0, g)),
                pl.BlockSpec((Cout, Kc), lambda g: (0, 0)),
            ],
            out_specs=pl.BlockSpec((Cout, Ns), lambda g: (0, g)),
            scratch_shapes=[pltpu.VMEM((Kc, Ns), jnp.float32)],
        ),
        compiler_params=pltpu.CompilerParams(
            dimension_semantics=("parallel",)),
    )(xk, w_full)

    # Valid-window slice; all channel permutes are already baked into the weight row order.
    z = out.reshape(ch_out, n_out, B, H, Wd)[:, :, :, :Ho, :Wo]
    return jnp.transpose(z, (2, 0, 1, 3, 4))                  # (B, ch_out, n_out, Ho, Wo)


def reference_forward(x, params, *, ch_in, n_in, ch_out, n_out, K):
    """Pure-JAX reference matching the PyTorch module semantics exactly."""
    wv, bv, wc, bc = params
    B, _, H, Wd = x.shape
    y = lax.conv_general_dilated(
        x, wv, window_strides=(1, 1), padding="VALID",
        dimension_numbers=("NCHW", "OIHW", "NCHW"),
        feature_group_count=ch_in) + bv[None, :, None, None]
    y = y.reshape(B, ch_in, n_out, H, Wd).transpose(0, 2, 1, 3, 4)
    y = y.reshape(B, n_out * ch_in, H, Wd)
    z = lax.conv_general_dilated(
        y, wc, window_strides=(1, 1), padding="VALID",
        dimension_numbers=("NCHW", "OIHW", "NCHW"),
        feature_group_count=n_out) + bc[None, :, None, None]
    Ho, Wo = z.shape[-2:]
    return z.reshape(B, n_out, ch_out, Ho, Wo).transpose(0, 2, 1, 3, 4)


if __name__ == "__main__":
    ch_in, n_in, ch_out, n_out, K = 4, 4, 4, 4, 3
    B, H, W = 2, 16, 16

    key = jax.random.PRNGKey(0)
    k1, k2, k3, k4, k5 = jax.random.split(key, 5)
    x = jax.random.normal(k1, (B, ch_in * n_in, H, W), jnp.float32)
    # deterministic synthetic parameters (shapes from nn.Conv2d in __init__)
    wv = jax.random.normal(k2, (ch_in * n_out, n_in, 1, 1), jnp.float32) * 0.1
    bv = jax.random.normal(k3, (ch_in * n_out,), jnp.float32) * 0.1
    wc = jax.random.normal(k4, (n_out * ch_out, ch_in, K, K), jnp.float32) * 0.1
    bc = jax.random.normal(k5, (n_out * ch_out,), jnp.float32) * 0.1
    params = (wv, bv, wc, bc)

    # Weight fusion hoisted out of the per-call path (done once at parameter load).
    w_full = fuse_capsule_params(params, ch_in=ch_in, n_in=n_in,
                                 ch_out=ch_out, n_out=n_out, K=K)

    out = capsules_forward(x, w_full, ch_in=ch_in, n_in=n_in,
                           ch_out=ch_out, n_out=n_out, K=K)
    out = jax.block_until_ready(out)

    ref = reference_forward(x, params, ch_in=ch_in, n_in=n_in,
                            ch_out=ch_out, n_out=n_out, K=K)
    assert out.shape == (B, ch_out, n_out, H - K + 1, W - K + 1), out.shape
    assert jnp.allclose(out, ref, atol=1e-4, rtol=1e-4), float(jnp.max(jnp.abs(out - ref)))
    print("KERNEL_OK")
</pallas_src>

<mosaic_0001>
module attributes {stable_mosaic.version = 11 : i64} {
  func.func @_caps_kernel(%arg0: i32, %arg1: memref<16x512xf32, #tpu.memory_space<vmem>>, %arg2: memref<16x152xf32, #tpu.memory_space<vmem>>, %arg3: memref<16x512xf32, #tpu.memory_space<vmem>>, %arg4: memref<152x512xf32, #tpu.memory_space<vmem>>) attributes {dimension_semantics = [#tpu.dimension_semantics<parallel>], iteration_bounds = array<i64: 1>, scalar_prefetch = 0 : i64, scratch_operands = 1 : i64, tpu.core_type = #tpu.core_type<tc>, window_params = [{transform_indices = @transform_0, window_bounds = array<i64: 16, 512>}, {pipeline_mode = #tpu.pipeline_mode<synchronous>, transform_indices = @transform_1, window_bounds = array<i64: 16, 152>}, {transform_indices = @transform_2, window_bounds = array<i64: 16, 512>}]} {
    %c0 = arith.constant 0 : index
    %c0_0 = arith.constant 0 : index
    %0 = vector.load %arg1[%c0, %c0_0] : memref<16x512xf32, #tpu.memory_space<vmem>>, vector<16x512xf32>
    %c0_1 = arith.constant 0 : index
    %c0_2 = arith.constant 0 : index
    %1 = vector.load %arg4[%c0_1, %c0_2] : memref<152x512xf32, #tpu.memory_space<vmem>>, vector<16x512xf32>
    tpu.vector_store %arg4[%c0_1, %c0_2], %0 {strides = array<i32>} : memref<152x512xf32, #tpu.memory_space<vmem>>, vector<16x512xf32>,
    %c511_i32 = arith.constant 511 : i32
    %2 = tpu.dynamic_rotate %0 by %c511_i32 dim 1 : vector<16x512xf32>, i32 -> vector<16x512xf32>
    %c16 = arith.constant 16 : index
    %c0_3 = arith.constant 0 : index
    %3 = vector.load %arg4[%c16, %c0_3] : memref<152x512xf32, #tpu.memory_space<vmem>>, vector<16x512xf32>
    tpu.vector_store %arg4[%c16, %c0_3], %2 {strides = array<i32>} : memref<152x512xf32, #tpu.memory_space<vmem>>, vector<16x512xf32>,
    %c510_i32 = arith.constant 510 : i32
    %4 = tpu.dynamic_rotate %0 by %c510_i32 dim 1 : vector<16x512xf32>, i32 -> vector<16x512xf32>
    %c32 = arith.constant 32 : index
    %c0_4 = arith.constant 0 : index
    %5 = vector.load %arg4[%c32, %c0_4] : memref<152x512xf32, #tpu.memory_space<vmem>>, vector<16x512xf32>
    tpu.vector_store %arg4[%c32, %c0_4], %4 {strides = array<i32>} : memref<152x512xf32, #tpu.memory_space<vmem>>, vector<16x512xf32>,
    %c496_i32 = arith.constant 496 : i32
    %6 = tpu.dynamic_rotate %0 by %c496_i32 dim 1 : vector<16x512xf32>, i32 -> vector<16x512xf32>
    %c48 = arith.constant 48 : index
    %c0_5 = arith.constant 0 : index
    %7 = vector.load %arg4[%c48, %c0_5] : memref<152x512xf32, #tpu.memory_space<vmem>>, vector<16x512xf32>
    tpu.vector_store %arg4[%c48, %c0_5], %6 {strides = array<i32>} : memref<152x512xf32, #tpu.memory_space<vmem>>, vector<16x512xf32>,
    %c495_i32 = arith.constant 495 : i32
    %8 = tpu.dynamic_rotate %0 by %c495_i32 dim 1 : vector<16x512xf32>, i32 -> vector<16x512xf32>
    %c64 = arith.constant 64 : index
    %c0_6 = arith.constant 0 : index
    %9 = vector.load %arg4[%c64, %c0_6] : memref<152x512xf32, #tpu.memory_space<vmem>>, vector<16x512xf32>
    tpu.vector_store %arg4[%c64, %c0_6], %8 {strides = array<i32>} : memref<152x512xf32, #tpu.memory_space<vmem>>, vector<16x512xf32>,
    %c494_i32 = arith.constant 494 : i32
    %10 = tpu.dynamic_rotate %0 by %c494_i32 dim 1 : vector<16x512xf32>, i32 -> vector<16x512xf32>
    %c80 = arith.constant 80 : index
    %c0_7 = arith.constant 0 : index
    %11 = vector.load %arg4[%c80, %c0_7] : memref<152x512xf32, #tpu.memory_space<vmem>>, vector<16x512xf32>
    tpu.vector_store %arg4[%c80, %c0_7], %10 {strides = array<i32>} : memref<152x512xf32, #tpu.memory_space<vmem>>, vector<16x512xf32>,
    %c480_i32 = arith.constant 480 : i32
    %12 = tpu.dynamic_rotate %0 by %c480_i32 dim 1 : vector<16x512xf32>, i32 -> vector<16x512xf32>
    %c96 = arith.constant 96 : index
    %c0_8 = arith.constant 0 : index
    %13 = vector.load %arg4[%c96, %c0_8] : memref<152x512xf32, #tpu.memory_space<vmem>>, vector<16x512xf32>
    tpu.vector_store %arg4[%c96, %c0_8], %12 {strides = array<i32>} : memref<152x512xf32, #tpu.memory_space<vmem>>, vector<16x512xf32>,
    %c479_i32 = arith.constant 479 : i32
    %14 = tpu.dynamic_rotate %0 by %c479_i32 dim 1 : vector<16x512xf32>, i32 -> vector<16x512xf32>
    %c112 = arith.constant 112 : index
    %c0_9 = arith.constant 0 : index
    %15 = vector.load %arg4[%c112, %c0_9] : memref<152x512xf32, #tpu.memory_space<vmem>>, vector<16x512xf32>
    tpu.vector_store %arg4[%c112, %c0_9], %14 {strides = array<i32>} : memref<152x512xf32, #tpu.memory_space<vmem>>, vector<16x512xf32>,
    %c478_i32 = arith.constant 478 : i32
    %16 = tpu.dynamic_rotate %0 by %c478_i32 dim 1 : vector<16x512xf32>, i32 -> vector<16x512xf32>
    %c128 = arith.constant 128 : index
    %c0_10 = arith.constant 0 : index
    %17 = vector.load %arg4[%c128, %c0_10] : memref<152x512xf32, #tpu.memory_space<vmem>>, vector<16x512xf32>
    tpu.vector_store %arg4[%c128, %c0_10], %16 {strides = array<i32>} : memref<152x512xf32, #tpu.memory_space<vmem>>, vector<16x512xf32>,
    %18 = tpu.iota {dimensions = array<i32: 0>} : vector<8x512xi32>
    %c0_i32 = arith.constant 0 : i32
    %19 = vector.broadcast %c0_i32 : i32 to vector<8x512xi32>
    %20 = arith.cmpi eq, %18, %19 : vector<8x512xi32>
    %cst = arith.constant 1.000000e+00 : f32
    %cst_11 = arith.constant 0.000000e+00 : f32
    %21 = vector.broadcast %cst : f32 to vector<8x512xf32>
    %22 = vector.broadcast %cst_11 : f32 to vector<8x512xf32>
    %23 = arith.select %20, %21, %22 : vector<8x512xi1>, vector<8x512xf32>
    %c144 = arith.constant 144 : index
    %c0_12 = arith.constant 0 : index
    %24 = vector.load %arg4[%c144, %c0_12] : memref<152x512xf32, #tpu.memory_space<vmem>>, vector<8x512xf32>
    tpu.vector_store %arg4[%c144, %c0_12], %23 {strides = array<i32>} : memref<152x512xf32, #tpu.memory_space<vmem>>, vector<8x512xf32>,
    %c0_13 = arith.constant 0 : index
    %c0_14 = arith.constant 0 : index
    %25 = vector.load %arg2[%c0_13, %c0_14] : memref<16x152xf32, #tpu.memory_space<vmem>>, vector<16x152xf32>
    %c0_15 = arith.constant 0 : index
    %c0_16 = arith.constant 0 : index
    %26 = vector.load %arg4[%c0_15, %c0_16] : memref<152x512xf32, #tpu.memory_space<vmem>>, vector<152x512xf32>
    %cst_17 = arith.constant dense<0.000000e+00> : vector<16x512xf32>
    %27 = tpu.matmul %25, %26, %cst_17 {dimension_numbers = #tpu.dot_dimension_numbers<[1], [0], [0], [1], [0, 0, 1, 1], [], []>} : vector<16x152xf32>, vector<152x512xf32>, vector<16x512xf32> -> vector<16x512xf32>
    %c0_18 = arith.constant 0 : index
    %c0_19 = arith.constant 0 : index
    %28 = vector.load %arg3[%c0_18, %c0_19] : memref<16x512xf32, #tpu.memory_space<vmem>>, vector<16x512xf32>
    tpu.vector_store %arg3[%c0_18, %c0_19], %27 {strides = array<i32>} : memref<16x512xf32, #tpu.memory_space<vmem>>, vector<16x512xf32>,
    return
  }
  func.func @transform_0(%arg0: i32) -> (i32, i32) {
    %c0_i32 = arith.constant 0 : i32
    %c0_i32_0 = arith.constant 0 : i32
    return %c0_i32, %arg0 : i32, i32
  }
  func.func @transform_1(%arg0: i32) -> (i32, i32) {
    %c0_i32 = arith.constant 0 : i32
    %c0_i32_0 = arith.constant 0 : i32
    %c0_i32_1 = arith.constant 0 : i32
    return %c0_i32, %c0_i32_0 : i32, i32
  }
  func.func @transform_2(%arg0: i32) -> (i32, i32) {
    %c0_i32 = arith.constant 0 : i32
    %c0_i32_0 = arith.constant 0 : i32
    return %c0_i32, %arg0 : i32, i32
  }
}

</mosaic_0001>

<llo_original>
// kernel: capsules_forward.1
$region0: #{capsules_forward.1}
  #allocation0 [shape = 'u32[]', space=smem, size = 0x4, offset = 0x4, fixed_abs, tag = 'smem constant byte address 0x4 - core index']
  #allocation1 [shape = 'u32[144,128]{1,0:T(1,128)}', space=vmem, size = 0x12000, scoped, tag = 'internal scratch']
  #allocation2 [shape = 'f32[152,512]{1,0:T(8,128)}', space=vmem, size = 0x4c000, scoped, tag = 'scratch operand']
  %s0 = inlined_call_operand.vmem [shape: f32[16,512], index: 0, kind: input, shape index: {}]
  %s1 = inlined_call_operand.vmem [shape: f32[16,152], index: 1, kind: input, shape index: {}]
  %s2 = inlined_call_operand.vmem [shape: f32[16,512], index: 2, kind: output, shape index: {}]
  %s3 = sld [smem:[#allocation0]]
  $region18: #{capsules_forward.1} parent=0
    _
  %s5 = ssub.s32 1, %s3
  %s6 = scalar_select 0, %s5, %s3
  // Predicated region
  $region2: #{capsules_forward.1} parent=0 // pred_check
    _
  $region3: #{capsules_forward.1} parent=0 // pred_check_branch
    %8 = sbr.rel (0) target = $region5
  $region4: #{capsules_forward.1} parent=0 // pred_region
    _
  $region5: #{capsules_forward.1} parent=0 // pred_fallthru
    _
  // Predicated region
  $region6: #{capsules_forward.1} parent=0 // pred_check
    _
  $region7: #{capsules_forward.1} parent=0 // pred_check_branch
    %10 = sbr.rel (0) target = $region9
  $region8: #{capsules_forward.1} parent=0 // pred_region
    _
  $region9: #{capsules_forward.1} parent=0 // pred_fallthru
    _
  %v11 = vld [vmem:[%s0] sm:$0xff]
  %v12 = vld [vmem:[%s0 + $0x8] sm:$0xff]
  %v13 = vld [vmem:[%s0 + $0x10] sm:$0xff]
  %v14 = vld [vmem:[%s0 + $0x18] sm:$0xff]
  %v15 = vld [vmem:[%s0 + $0x20] sm:$0xff]
  %v16 = vld [vmem:[%s0 + $0x28] sm:$0xff]
  %v17 = vld [vmem:[%s0 + $0x30] sm:$0xff]
  %v18 = vld [vmem:[%s0 + $0x38] sm:$0xff]
  %19 = vst [vmem:[#allocation2] sm:$0xff] %v11
  %20 = vst [vmem:[#allocation2 + $0x8] sm:$0xff] %v12
  %21 = vst [vmem:[#allocation2 + $0x10] sm:$0xff] %v13
  %22 = vst [vmem:[#allocation2 + $0x18] sm:$0xff] %v14
  %23 = vst [vmem:[#allocation2 + $0x20] sm:$0xff] %v15
  %24 = vst [vmem:[#allocation2 + $0x28] sm:$0xff] %v16
  %25 = vst [vmem:[#allocation2 + $0x30] sm:$0xff] %v17
  %26 = vst [vmem:[#allocation2 + $0x38] sm:$0xff] %v18
  %27 = vrot.lane.b32.xlu0 %v11, 127
  %v28 = vpop.permute.xlu0 %27
  %29 = vrot.lane.b32.xlu0 %v15, 127
  %v30 = vpop.permute.xlu0 %29
  %31 = vrot.lane.b32.xlu0 %v12, 127
  %v32 = vpop.permute.xlu0 %31
  %33 = vrot.lane.b32.xlu0 %v16, 127
  %v34 = vpop.permute.xlu0 %33
  %35 = vrot.lane.b32.xlu0 %v13, 127
  %v36 = vpop.permute.xlu0 %35
  %37 = vrot.lane.b32.xlu0 %v17, 127
  %v38 = vpop.permute.xlu0 %37
  %39 = vrot.lane.b32.xlu0 %v14, 127
  %v40 = vpop.permute.xlu0 %39
  %41 = vrot.lane.b32.xlu0 %v18, 127
  %v42 = vpop.permute.xlu0 %41
  %v43 = vlaneseq
  %v44 = vand.u32 %v43, 127
  %vm45 = vcmp.lt.s32.totalorder %v44, 127
  %v46 = vsel %vm45, %v36, %v40
  %v47 = vsel %vm45, %v38, %v42
  %v48 = vsel %vm45, %v32, %v36
  %v49 = vsel %vm45, %v34, %v38
  %v50 = vsel %vm45, %v28, %v32
  %v51 = vsel %vm45, %v30, %v34
  %v52 = vsel %vm45, %v40, %v28
  %v53 = vsel %vm45, %v42, %v30
  %54 = vst [vmem:[#allocation2 + $0x40] sm:$0xff] %v50
  %55 = vst [vmem:[#allocation2 + $0x48] sm:$0xff] %v48
  %56 = vst [vmem:[#allocation2 + $0x50] sm:$0xff] %v46
  %57 = vst [vmem:[#allocation2 + $0x58] sm:$0xff] %v52
  %58 = vst [vmem:[#allocation2 + $0x60] sm:$0xff] %v51
  %59 = vst [vmem:[#allocation2 + $0x68] sm:$0xff] %v49
  %60 = vst [vmem:[#allocation2 + $0x70] sm:$0xff] %v47
  %61 = vst [vmem:[#allocation2 + $0x78] sm:$0xff] %v53
  %62 = vrot.lane.b32.xlu0 %v11, 126
  %v63 = vpop.permute.xlu0 %62
  %64 = vrot.lane.b32.xlu0 %v15, 126
  %v65 = vpop.permute.xlu0 %64
  %66 = vrot.lane.b32.xlu0 %v12, 126
  %v67 = vpop.permute.xlu0 %66
  %68 = vrot.lane.b32.xlu0 %v16, 126
  %v69 = vpop.permute.xlu0 %68
  %70 = vrot.lane.b32.xlu0 %v13, 126
  %v71 = vpop.permute.xlu0 %70
  %72 = vrot.lane.b32.xlu0 %v17, 126
  %v73 = vpop.permute.xlu0 %72
  %74 = vrot.lane.b32.xlu0 %v14, 126
  %v75 = vpop.permute.xlu0 %74
  %76 = vrot.lane.b32.xlu0 %v18, 126
  %v77 = vpop.permute.xlu0 %76
  %vm78 = vcmp.lt.s32.totalorder %v44, 126
  %v79 = vsel %vm78, %v71, %v75
  %v80 = vsel %vm78, %v73, %v77
  %v81 = vsel %vm78, %v67, %v71
  %v82 = vsel %vm78, %v69, %v73
  %v83 = vsel %vm78, %v63, %v67
  %v84 = vsel %vm78, %v65, %v69
  %v85 = vsel %vm78, %v75, %v63
  %v86 = vsel %vm78, %v77, %v65
  %87 = vst [vmem:[#allocation2 + $0x80] sm:$0xff] %v83
  %88 = vst [vmem:[#allocation2 + $0x88] sm:$0xff] %v81
  %89 = vst [vmem:[#allocation2 + $0x90] sm:$0xff] %v79
  %90 = vst [vmem:[#allocation2 + $0x98] sm:$0xff] %v85
  %91 = vst [vmem:[#allocation2 + $0xa0] sm:$0xff] %v84
  %92 = vst [vmem:[#allocation2 + $0xa8] sm:$0xff] %v82
  %93 = vst [vmem:[#allocation2 + $0xb0] sm:$0xff] %v80
  %94 = vst [vmem:[#allocation2 + $0xb8] sm:$0xff] %v86
  %95 = vrot.lane.b32.xlu0 %v11, 112
  %v96 = vpop.permute.xlu0 %95
  %97 = vrot.lane.b32.xlu0 %v15, 112
  %v98 = vpop.permute.xlu0 %97
  %99 = vrot.lane.b32.xlu0 %v12, 112
  %v100 = vpop.permute.xlu0 %99
  %101 = vrot.lane.b32.xlu0 %v16, 112
  %v102 = vpop.permute.xlu0 %101
  %103 = vrot.lane.b32.xlu0 %v13, 112
  %v104 = vpop.permute.xlu0 %103
  %105 = vrot.lane.b32.xlu0 %v17, 112
  %v106 = vpop.permute.xlu0 %105
  %107 = vrot.lane.b32.xlu0 %v14, 112
  %v108 = vpop.permute.xlu0 %107
  %109 = vrot.lane.b32.xlu0 %v18, 112
  %v110 = vpop.permute.xlu0 %109
  %vm111 = vcmp.lt.s32.totalorder %v44, 112
  %v112 = vsel %vm111, %v104, %v108
  %v113 = vsel %vm111, %v106, %v110
  %v114 = vsel %vm111, %v100, %v104
  %v115 = vsel %vm111, %v102, %v106
  %v116 = vsel %vm111, %v96, %v100
  %v117 = vsel %vm111, %v98, %v102
  %v118 = vsel %vm111, %v108, %v96
  %v119 = vsel %vm111, %v110, %v98
  %120 = vst [vmem:[#allocation2 + $0xc0] sm:$0xff] %v116
  %121 = vst [vmem:[#allocation2 + $0xc8] sm:$0xff] %v114
  %122 = vst [vmem:[#allocation2 + $0xd0] sm:$0xff] %v112
  %123 = vst [vmem:[#allocation2 + $0xd8] sm:$0xff] %v118
  %124 = vst [vmem:[#allocation2 + $0xe0] sm:$0xff] %v117
  %125 = vst [vmem:[#allocation2 + $0xe8] sm:$0xff] %v115
  %126 = vst [vmem:[#allocation2 + $0xf0] sm:$0xff] %v113
  %127 = vst [vmem:[#allocation2 + $0xf8] sm:$0xff] %v119
  %128 = vrot.lane.b32.xlu0 %v11, 111
  %v129 = vpop.permute.xlu0 %128
  %130 = vrot.lane.b32.xlu0 %v15, 111
  %v131 = vpop.permute.xlu0 %130
  %132 = vrot.lane.b32.xlu0 %v12, 111
  %v133 = vpop.permute.xlu0 %132
  %134 = vrot.lane.b32.xlu0 %v16, 111
  %v135 = vpop.permute.xlu0 %134
  %136 = vrot.lane.b32.xlu0 %v13, 111
  %v137 = vpop.permute.xlu0 %136
  %138 = vrot.lane.b32.xlu0 %v17, 111
  %v139 = vpop.permute.xlu0 %138
  %140 = vrot.lane.b32.xlu0 %v14, 111
  %v141 = vpop.permute.xlu0 %140
  %142 = vrot.lane.b32.xlu0 %v18, 111
  %v143 = vpop.permute.xlu0 %142
  %vm144 = vcmp.lt.s32.totalorder %v44, 111
  %v145 = vsel %vm144, %v137, %v141
  %v146 = vsel %vm144, %v139, %v143
  %v147 = vsel %vm144, %v133, %v137
  %v148 = vsel %vm144, %v135, %v139
  %v149 = vsel %vm144, %v129, %v133
  %v150 = vsel %vm144, %v131, %v135
  %v151 = vsel %vm144, %v141, %v129
  %v152 = vsel %vm144, %v143, %v131
  %153 = vst [vmem:[#allocation2 + $0x100] sm:$0xff] %v149
  %154 = vst [vmem:[#allocation2 + $0x108] sm:$0xff] %v147
  %155 = vst [vmem:[#allocation2 + $0x110] sm:$0xff] %v145
  %156 = vst [vmem:[#allocation2 + $0x118] sm:$0xff] %v151
  %157 = vst [vmem:[#allocation2 + $0x120] sm:$0xff] %v150
  %158 = vst [vmem:[#allocation2 + $0x128] sm:$0xff] %v148
  %159 = vst [vmem:[#allocation2 + $0x130] sm:$0xff] %v146
  %160 = vst [vmem:[#allocation2 + $0x138] sm:$0xff] %v152
  %161 = vrot.lane.b32.xlu0 %v11, 110
  %v162 = vpop.permute.xlu0 %161
  %163 = vrot.lane.b32.xlu0 %v15, 110
  %v164 = vpop.permute.xlu0 %163
  %165 = vrot.lane.b32.xlu0 %v12, 110
  %v166 = vpop.permute.xlu0 %165
  %167 = vrot.lane.b32.xlu0 %v16, 110
  %v168 = vpop.permute.xlu0 %167
  %169 = vrot.lane.b32.xlu0 %v13, 110
  %v170 = vpop.permute.xlu0 %169
  %171 = vrot.lane.b32.xlu0 %v17, 110
  %v172 = vpop.permute.xlu0 %171
  %173 = vrot.lane.b32.xlu0 %v14, 110
  %v174 = vpop.permute.xlu0 %173
  %175 = vrot.lane.b32.xlu0 %v18, 110
  %v176 = vpop.permute.xlu0 %175
  %vm177 = vcmp.lt.s32.totalorder %v44, 110
  %v178 = vsel %vm177, %v170, %v174
  %v179 = vsel %vm177, %v172, %v176
  %v180 = vsel %vm177, %v166, %v170
  %v181 = vsel %vm177, %v168, %v172
  %v182 = vsel %vm177, %v162, %v166
  %v183 = vsel %vm177, %v164, %v168
  %v184 = vsel %vm177, %v174, %v162
  %v185 = vsel %vm177, %v176, %v164
  %186 = vst [vmem:[#allocation2 + $0x140] sm:$0xff] %v182
  %187 = vst [vmem:[#allocation2 + $0x148] sm:$0xff] %v180
  %188 = vst [vmem:[#allocation2 + $0x150] sm:$0xff] %v178
  %189 = vst [vmem:[#allocation2 + $0x158] sm:$0xff] %v184
  %190 = vst [vmem:[#allocation2 + $0x160] sm:$0xff] %v183
  %191 = vst [vmem:[#allocation2 + $0x168] sm:$0xff] %v181
  %192 = vst [vmem:[#allocation2 + $0x170] sm:$0xff] %v179
  %193 = vst [vmem:[#allocation2 + $0x178] sm:$0xff] %v185
  %194 = vrot.lane.b32.xlu0 %v11, 96
  %v195 = vpop.permute.xlu0 %194
  %196 = vrot.lane.b32.xlu0 %v15, 96
  %v197 = vpop.permute.xlu0 %196
  %198 = vrot.lane.b32.xlu0 %v12, 96
  %v199 = vpop.permute.xlu0 %198
  %200 = vrot.lane.b32.xlu0 %v16, 96
  %v201 = vpop.permute.xlu0 %200
  %202 = vrot.lane.b32.xlu0 %v13, 96
  %v203 = vpop.permute.xlu0 %202
  %204 = vrot.lane.b32.xlu0 %v17, 96
  %v205 = vpop.permute.xlu0 %204
  %206 = vrot.lane.b32.xlu0 %v14, 96
  %v207 = vpop.permute.xlu0 %206
  %208 = vrot.lane.b32.xlu0 %v18, 96
  %v209 = vpop.permute.xlu0 %208
  %vm210 = vcmp.lt.s32.totalorder %v44, 96
  %v211 = vsel %vm210, %v203, %v207
  %v212 = vsel %vm210, %v205, %v209
  %v213 = vsel %vm210, %v199, %v203
  %v214 = vsel %vm210, %v201, %v205
  %v215 = vsel %vm210, %v195, %v199
  %v216 = vsel %vm210, %v197, %v201
  %v217 = vsel %vm210, %v207, %v195
  %v218 = vsel %vm210, %v209, %v197
  %219 = vst [vmem:[#allocation2 + $0x180] sm:$0xff] %v215
  %220 = vst [vmem:[#allocation2 + $0x188] sm:$0xff] %v213
  %221 = vst [vmem:[#allocation2 + $0x190] sm:$0xff] %v211
  %222 = vst [vmem:[#allocation2 + $0x198] sm:$0xff] %v217
  %223 = vst [vmem:[#allocation2 + $0x1a0] sm:$0xff] %v216
  %224 = vst [vmem:[#allocation2 + $0x1a8] sm:$0xff] %v214
  %225 = vst [vmem:[#allocation2 + $0x1b0] sm:$0xff] %v212
  %226 = vst [vmem:[#allocation2 + $0x1b8] sm:$0xff] %v218
  %227 = vrot.lane.b32.xlu0 %v11, 95
  %v228 = vpop.permute.xlu0 %227
  %229 = vrot.lane.b32.xlu0 %v15, 95
  %v230 = vpop.permute.xlu0 %229
  %231 = vrot.lane.b32.xlu0 %v12, 95
  %v232 = vpop.permute.xlu0 %231
  %233 = vrot.lane.b32.xlu0 %v16, 95
  %v234 = vpop.permute.xlu0 %233
  %235 = vrot.lane.b32.xlu0 %v13, 95
  %v236 = vpop.permute.xlu0 %235
  %237 = vrot.lane.b32.xlu0 %v17, 95
  %v238 = vpop.permute.xlu0 %237
  %239 = vrot.lane.b32.xlu0 %v14, 95
  %v240 = vpop.permute.xlu0 %239
  %241 = vrot.lane.b32.xlu0 %v18, 95
  %v242 = vpop.permute.xlu0 %241
  %vm243 = vcmp.lt.s32.totalorder %v44, 95
  %v244 = vsel %vm243, %v236, %v240
  %v245 = vsel %vm243, %v238, %v242
  %v246 = vsel %vm243, %v232, %v236
  %v247 = vsel %vm243, %v234, %v238
  %v248 = vsel %vm243, %v228, %v232
  %v249 = vsel %vm243, %v230, %v234
  %v250 = vsel %vm243, %v240, %v228
  %v251 = vsel %vm243, %v242, %v230
  %252 = vst [vmem:[#allocation2 + $0x1c0] sm:$0xff] %v248
  %253 = vst [vmem:[#allocation2 + $0x1c8] sm:$0xff] %v246
  %254 = vst [vmem:[#allocation2 + $0x1d0] sm:$0xff] %v244
  %255 = vst [vmem:[#allocation2 + $0x1d8] sm:$0xff] %v250
  %256 = vst [vmem:[#allocation2 + $0x1e0] sm:$0xff] %v249
  %257 = vst [vmem:[#allocation2 + $0x1e8] sm:$0xff] %v247
  %258 = vst [vmem:[#allocation2 + $0x1f0] sm:$0xff] %v245
  %259 = vst [vmem:[#allocation2 + $0x1f8] sm:$0xff] %v251
  %260 = vrot.lane.b32.xlu0 %v11, 94
  %v261 = vpop.permute.xlu0 %260
  %262 = vrot.lane.b32.xlu0 %v15, 94
  %v263 = vpop.permute.xlu0 %262
  %264 = vrot.lane.b32.xlu0 %v12, 94
  %v265 = vpop.permute.xlu0 %264
  %266 = vrot.lane.b32.xlu0 %v16, 94
  %v267 = vpop.permute.xlu0 %266
  %268 = vrot.lane.b32.xlu0 %v13, 94
  %v269 = vpop.permute.xlu0 %268
  %270 = vrot.lane.b32.xlu0 %v17, 94
  %v271 = vpop.permute.xlu0 %270
  %272 = vrot.lane.b32.xlu0 %v14, 94
  %v273 = vpop.permute.xlu0 %272
  %274 = vrot.lane.b32.xlu0 %v18, 94
  %v275 = vpop.permute.xlu0 %274
  %vm276 = vcmp.lt.s32.totalorder %v44, 94
  %v277 = vsel %vm276, %v269, %v273
  %v278 = vsel %vm276, %v271, %v275
  %v279 = vsel %vm276, %v265, %v269
  %v280 = vsel %vm276, %v267, %v271
  %v281 = vsel %vm276, %v261, %v265
  %v282 = vsel %vm276, %v263, %v267
  %v283 = vsel %vm276, %v273, %v261
  %v284 = vsel %vm276, %v275, %v263
  %285 = vst [vmem:[#allocation2 + $0x200] sm:$0xff] %v281
  %286 = vst [vmem:[#allocation2 + $0x208] sm:$0xff] %v279
  %287 = vst [vmem:[#allocation2 + $0x210] sm:$0xff] %v277
  %288 = vst [vmem:[#allocation2 + $0x218] sm:$0xff] %v283
  %289 = vst [vmem:[#allocation2 + $0x220] sm:$0xff] %v282
  %290 = vst [vmem:[#allocation2 + $0x228] sm:$0xff] %v280
  %291 = vst [vmem:[#allocation2 + $0x230] sm:$0xff] %v278
  %292 = vst [vmem:[#allocation2 + $0x238] sm:$0xff] %v284
  %v293 = vlaneseq
  %v294 = vshrl.u32 %v293, 7
  %vm295 = vcmp.eq.s32.totalorder %v294, 0
  %v296 = vsel %vm295, 1.0, 0.0
  %297 = vst [vmem:[#allocation2 + $0x240] sm:$0xff] %v296
  %298 = vst [vmem:[#allocation2 + $0x248] sm:$0xff] %v296
  %299 = vst [vmem:[#allocation2 + $0x250] sm:$0xff] %v296
  %300 = vst [vmem:[#allocation2 + $0x258] sm:$0xff] %v296
  %v301 = vld [vmem:[%s1] sm:$0xff]
  %v302 = vld [vmem:[%s1 + $0x8] sm:$0xff]
  %v303 = vld [vmem:[%s1 + $0x10] sm:$0xff]
  %v304 = vld [vmem:[%s1 + $0x18] sm:$0xff]
  %v305 = vld [vmem:[#allocation2] sm:$0xff]
  %v306 = vld [vmem:[#allocation2 + $0x8] sm:$0xff]
  %v307 = vld [vmem:[#allocation2 + $0x10] sm:$0xff]
  %v308 = vld [vmem:[#allocation2 + $0x18] sm:$0xff]
  %v309 = vld [vmem:[#allocation2 + $0x20] sm:$0xff]
  %v310 = vld [vmem:[#allocation2 + $0x28] sm:$0xff]
  %v311 = vld [vmem:[#allocation2 + $0x30] sm:$0xff]
  %v312 = vld [vmem:[#allocation2 + $0x38] sm:$0xff]
  %v313 = vld [vmem:[#allocation2 + $0x40] sm:$0xff]
  %v314 = vld [vmem:[#allocation2 + $0x48] sm:$0xff]
  %v315 = vld [vmem:[#allocation2 + $0x50] sm:$0xff]
  %v316 = vld [vmem:[#allocation2 + $0x58] sm:$0xff]
  %v317 = vld [vmem:[#allocation2 + $0x60] sm:$0xff]
  %v318 = vld [vmem:[#allocation2 + $0x68] sm:$0xff]
  %v319 = vld [vmem:[#allocation2 + $0x70] sm:$0xff]
  %v320 = vld [vmem:[#allocation2 + $0x78] sm:$0xff]
  %v321 = vld [vmem:[#allocation2 + $0x80] sm:$0xff]
  %v322 = vld [vmem:[#allocation2 + $0x88] sm:$0xff]
  %v323 = vld [vmem:[#allocation2 + $0x90] sm:$0xff]
  %v324 = vld [vmem:[#allocation2 + $0x98] sm:$0xff]
  %v325 = vld [vmem:[#allocation2 + $0xa0] sm:$0xff]
  %v326 = vld [vmem:[#allocation2 + $0xa8] sm:$0xff]
  %v327 = vld [vmem:[#allocation2 + $0xb0] sm:$0xff]
  %v328 = vld [vmem:[#allocation2 + $0xb8] sm:$0xff]
  %v329 = vld [vmem:[#allocation2 + $0xc0] sm:$0xff]
  %v330 = vld [vmem:[#allocation2 + $0xc8] sm:$0xff]
  %v331 = vld [vmem:[#allocation2 + $0xd0] sm:$0xff]
  %v332 = vld [vmem:[#allocation2 + $0xd8] sm:$0xff]
  %v333 = vld [vmem:[#allocation2 + $0xe0] sm:$0xff]
  %v334 = vld [vmem:[#allocation2 + $0xe8] sm:$0xff]
  %v335 = vld [vmem:[#allocation2 + $0xf0] sm:$0xff]
  %v336 = vld [vmem:[#allocation2 + $0xf8] sm:$0xff]
  %v337 = vld [vmem:[#allocation2 + $0x100] sm:$0xff]
  %v338 = vld [vmem:[#allocation2 + $0x108] sm:$0xff]
  %v339 = vld [vmem:[#allocation2 + $0x110] sm:$0xff]
  %v340 = vld [vmem:[#allocation2 + $0x118] sm:$0xff]
  %v341 = vld [vmem:[#allocation2 + $0x120] sm:$0xff]
  %v342 = vld [vmem:[#allocation2 + $0x128] sm:$0xff]
  %v343 = vld [vmem:[#allocation2 + $0x130] sm:$0xff]
  %v344 = vld [vmem:[#allocation2 + $0x138] sm:$0xff]
  %v345 = vld [vmem:[#allocation2 + $0x140] sm:$0xff]
  %v346 = vld [vmem:[#allocation2 + $0x148] sm:$0xff]
  %v347 = vld [vmem:[#allocation2 + $0x150] sm:$0xff]
  %v348 = vld [vmem:[#allocation2 + $0x158] sm:$0xff]
  %v349 = vld [vmem:[#allocation2 + $0x160] sm:$0xff]
  %v350 = vld [vmem:[#allocation2 + $0x168] sm:$0xff]
  %v351 = vld [vmem:[#allocation2 + $0x170] sm:$0xff]
  %v352 = vld [vmem:[#allocation2 + $0x178] sm:$0xff]
  %v353 = vld [vmem:[#allocation2 + $0x180] sm:$0xff]
  %v354 = vld [vmem:[#allocation2 + $0x188] sm:$0xff]
  %v355 = vld [vmem:[#allocation2 + $0x190] sm:$0xff]
  %v356 = vld [vmem:[#allocation2 + $0x198] sm:$0xff]
  %v357 = vld [vmem:[#allocation2 + $0x1a0] sm:$0xff]
  %v358 = vld [vmem:[#allocation2 + $0x1a8] sm:$0xff]
  %v359 = vld [vmem:[#allocation2 + $0x1b0] sm:$0xff]
  %v360 = vld [vmem:[#allocation2 + $0x1b8] sm:$0xff]
  %v361 = vld [vmem:[#allocation2 + $0x1c0] sm:$0xff]
  %v362 = vld [vmem:[#allocation2 + $0x1c8] sm:$0xff]
  %v363 = vld [vmem:[#allocation2 + $0x1d0] sm:$0xff]
  %v364 = vld [vmem:[#allocation2 + $0x1d8] sm:$0xff]
  %v365 = vld [vmem:[#allocation2 + $0x1e0] sm:$0xff]
  %v366 = vld [vmem:[#allocation2 + $0x1e8] sm:$0xff]
  %v367 = vld [vmem:[#allocation2 + $0x1f0] sm:$0xff]
  %v368 = vld [vmem:[#allocation2 + $0x1f8] sm:$0xff]
  %v369 = vld [vmem:[#allocation2 + $0x200] sm:$0xff]
  %v370 = vld [vmem:[#allocation2 + $0x208] sm:$0xff]
  %v371 = vld [vmem:[#allocation2 + $0x210] sm:$0xff]
  %v372 = vld [vmem:[#allocation2 + $0x218] sm:$0xff]
  %v373 = vld [vmem:[#allocation2 + $0x220] sm:$0xff]
  %v374 = vld [vmem:[#allocation2 + $0x228] sm:$0xff]
  %v375 = vld [vmem:[#allocation2 + $0x230] sm:$0xff]
  %v376 = vld [vmem:[#allocation2 + $0x238] sm:$0xff]
  %v377 = vld [vmem:[#allocation2 + $0x240] sm:$0xff]
  %v378 = vld [vmem:[#allocation2 + $0x248] sm:$0xff]
  %v379 = vld [vmem:[#allocation2 + $0x250] sm:$0xff]
  %v380 = vld [vmem:[#allocation2 + $0x258] sm:$0xff]
  %vm381 = vcmask 195584
  %v383 = vsel %vm381, %v302, 0
  %v386 = vsel %vm381, %v304, 0
  %388 = vmatprep.subr.mxu0 %v306
  %389 = vmatpush1.msra.mxu0 %v305
  %390 = vmatprep.subr.mxu0 %v310
  %391 = vmatpush1.msra.mxu0 %v309
  %392 = vmatprep.subr.mxu0 %v314
  %393 = vmatpush1.msra.mxu0 %v313
  %394 = vmatprep.subr.mxu0 %v318
  %395 = vmatpush1.msra.mxu0 %v317
  %396 = vmatprep.subr.mxu0 %v322
  %397 = vmatpush1.msra.mxu0 %v321
  %398 = vmatprep.subr.mxu0 %v326
  %399 = vmatpush1.msra.mxu0 %v325
  %400 = vmatprep.subr.mxu0 %v330
  %401 = vmatpush1.msra.mxu0 %v329
  %402 = vmatprep.subr.mxu0 %v334
  %403 = vmatpush1.msra.mxu0 %v333
  %404 = vmatprep.subr.mxu0 %v338
  %405 = vmatpush1.msra.mxu0 %v337
  %406 = vmatprep.subr.mxu0 %v342
  %407 = vmatpush1.msra.mxu0 %v341
  %408 = vmatprep.subr.mxu0 %v346
  %409 = vmatpush1.msra.mxu0 %v345
  %410 = vmatprep.subr.mxu0 %v350
  %411 = vmatpush1.msra.mxu0 %v349
  %412 = vmatprep.subr.mxu0 %v354
  %413 = vmatpush1.msra.mxu0 %v353
  %414 = vmatprep.subr.mxu0 %v358
  %415 = vmatpush1.msra.mxu0 %v357
  %416 = vmatprep.subr.mxu0 %v362
  %417 = vmatpush1.msra.mxu0 %v361
  %418 = vmatprep.subr.mxu0 %v366
  %419 = vmatpush1.msra.mxu0 %v365
  %420 = vmatprep.subr.mxu0 %v370
  %421 = vmatpush1.msra.mxu0 %v369
  %422 = vmatprep.subr.mxu0 %v374
  %423 = vmatpush1.msra.mxu0 %v373
  %424 = vmatprep.subr.mxu0 %v378
  %425 = vmatpush1.msra.mxu0 %v377
  %426 = vmatprep.subr.mxu0 0.0
  %427 = vmatpush1.msra.mxu0 0.0
  %428 = vmatprep.subr.mxu0 0.0
  %429 = vmatpush1.msra.mxu0 0.0
  %430 = vmatprep.subr.mxu0 0.0
  %431 = vmatpush1.msra.mxu0 0.0
  %432 = vmatprep.subr.mxu0 0.0
  %433 = vmatpush1.msra.mxu0 0.0
  %434 = vmatprep.subr.mxu0 0.0
  %435 = vmatpush1.msra.mxu0 0.0
  %436 = vmatprep.subr.mxu0 0.0
  %437 = vmatpush1.msra.mxu0 0.0
  %438 = vmatprep.subr.mxu0 0.0
  %439 = vmatpush1.msra.mxu0 0.0
  %440 = vmatprep.subr.mxu0 0.0
  %441 = vmatpush1.msra.mxu0 0.0
  %442 = vmatprep.subr.mxu0 0.0
  %443 = vmatpush1.msra.mxu0 0.0
  %444 = vmatprep.subr.mxu0 0.0
  %445 = vmatpush1.msra.mxu0 0.0
  %446 = vmatprep.subr.mxu0 0.0
  %447 = vmatpush1.msra.mxu0 0.0
  %448 = vmatprep.subr.mxu0 0.0
  %449 = vmatpush1.msra.mxu0 0.0
  %450 = vmatprep.subr.mxu0 0.0
  %451 = vmatpush1.msra.mxu0 0.0
  %452 = vmatprep.mubr.f32.mxu0 %v383
  %453 = vmatmul.mubr.f32.gmra.mrb[0].mxu0 %v301
  %v454 = vpop.f32.mrb[0].mxu0
  %v455 = vadd.f32 0.0, %v454
  %v456 = vpop.f32.mrb[0].mxu0
  %v457 = vadd.f32 0.0, %v456
  %458 = vmatprep.mubr.f32.mxu0 %v386
  %459 = vmatmul.mubr.f32.gmra.mrb[0].mxu0 %v303
  %v460 = vpop.f32.mrb[0].mxu0
  %v461 = vadd.f32 0.0, %v460
  %v462 = vpop.f32.mrb[0].mxu0
  %v463 = vadd.f32 0.0, %v462
  %464 = vdwg.mxu0
  %465 = vmatprep.subr.mxu0 %v308
  %466 = vmatpush1.msra.mxu0 %v307
  %467 = vmatprep.subr.mxu0 %v312
  %468 = vmatpush1.msra.mxu0 %v311
  %469 = vmatprep.subr.mxu0 %v316
  %470 = vmatpush1.msra.mxu0 %v315
  %471 = vmatprep.subr.mxu0 %v320
  %472 = vmatpush1.msra.mxu0 %v319
  %473 = vmatprep.subr.mxu0 %v324
  %474 = vmatpush1.msra.mxu0 %v323
  %475 = vmatprep.subr.mxu0 %v328
  %476 = vmatpush1.msra.mxu0 %v327
  %477 = vmatprep.subr.mxu0 %v332
  %478 = vmatpush1.msra.mxu0 %v331
  %479 = vmatprep.subr.mxu0 %v336
  %480 = vmatpush1.msra.mxu0 %v335
  %481 = vmatprep.subr.mxu0 %v340
  %482 = vmatpush1.msra.mxu0 %v339
  %483 = vmatprep.subr.mxu0 %v344
  %484 = vmatpush1.msra.mxu0 %v343
  %485 = vmatprep.subr.mxu0 %v348
  %486 = vmatpush1.msra.mxu0 %v347
  %487 = vmatprep.subr.mxu0 %v352
  %488 = vmatpush1.msra.mxu0 %v351
  %489 = vmatprep.subr.mxu0 %v356
  %490 = vmatpush1.msra.mxu0 %v355
  %491 = vmatprep.subr.mxu0 %v360
  %492 = vmatpush1.msra.mxu0 %v359
  %493 = vmatprep.subr.mxu0 %v364
  %494 = vmatpush1.msra.mxu0 %v363
  %495 = vmatprep.subr.mxu0 %v368
  %496 = vmatpush1.msra.mxu0 %v367
  %497 = vmatprep.subr.mxu0 %v372
  %498 = vmatpush1.msra.mxu0 %v371
  %499 = vmatprep.subr.mxu0 %v376
  %500 = vmatpush1.msra.mxu0 %v375
  %501 = vmatprep.subr.mxu0 %v380
  %502 = vmatpush1.msra.mxu0 %v379
  %503 = vmatprep.subr.mxu0 0.0
  %504 = vmatpush1.msra.mxu0 0.0
  %505 = vmatprep.subr.mxu0 0.0
  %506 = vmatpush1.msra.mxu0 0.0
  %507 = vmatprep.subr.mxu0 0.0
  %508 = vmatpush1.msra.mxu0 0.0
  %509 = vmatprep.subr.mxu0 0.0
  %510 = vmatpush1.msra.mxu0 0.0
  %511 = vmatprep.subr.mxu0 0.0
  %512 = vmatpush1.msra.mxu0 0.0
  %513 = vmatprep.subr.mxu0 0.0
  %514 = vmatpush1.msra.mxu0 0.0
  %515 = vmatprep.subr.mxu0 0.0
  %516 = vmatpush1.msra.mxu0 0.0
  %517 = vmatprep.subr.mxu0 0.0
  %518 = vmatpush1.msra.mxu0 0.0
  %519 = vmatprep.subr.mxu0 0.0
  %520 = vmatpush1.msra.mxu0 0.0
  %521 = vmatprep.subr.mxu0 0.0
  %522 = vmatpush1.msra.mxu0 0.0
  %523 = vmatprep.subr.mxu0 0.0
  %524 = vmatpush1.msra.mxu0 0.0
  %525 = vmatprep.subr.mxu0 0.0
  %526 = vmatpush1.msra.mxu0 0.0
  %527 = vmatprep.subr.mxu0 0.0
  %528 = vmatpush1.msra.mxu0 0.0
  %529 = vmatprep.mubr.f32.mxu0 %v383
  %530 = vmatmul.mubr.f32.gmra.mrb[0].mxu0 %v301
  %v531 = vpop.f32.mrb[0].mxu0
  %v532 = vadd.f32 0.0, %v531
  %v533 = vpop.f32.mrb[0].mxu0
  %v534 = vadd.f32 0.0, %v533
  %535 = vmatprep.mubr.f32.mxu0 %v386
  %536 = vmatmul.mubr.f32.gmra.mrb[0].mxu0 %v303
  %v537 = vpop.f32.mrb[0].mxu0
  %v538 = vadd.f32 0.0, %v537
  %v539 = vpop.f32.mrb[0].mxu0
  %v540 = vadd.f32 0.0, %v539
  %541 = vdwg.mxu0
  %542 = vst [vmem:[%s2] sm:$0xff] %v455
  %543 = vst [vmem:[%s2 + $0x8] sm:$0xff] %v457
  %544 = vst [vmem:[%s2 + $0x10] sm:$0xff] %v532
  %545 = vst [vmem:[%s2 + $0x18] sm:$0xff] %v534
  %546 = vst [vmem:[%s2 + $0x20] sm:$0xff] %v461
  %547 = vst [vmem:[%s2 + $0x28] sm:$0xff] %v463
  %548 = vst [vmem:[%s2 + $0x30] sm:$0xff] %v538
  %549 = vst [vmem:[%s2 + $0x38] sm:$0xff] %v540
  // Predicated region
  $region10: #{capsules_forward.1} parent=0 // pred_check
    _
  $region11: #{capsules_forward.1} parent=0 // pred_check_branch
    %551 = sbr.rel (0) target = $region13
  $region12: #{capsules_forward.1} parent=0 // pred_region
    _
  $region13: #{capsules_forward.1} parent=0 // pred_fallthru
    _
  // Predicated region
  $region14: #{capsules_forward.1} parent=0 // pred_check
    _
  $region15: #{capsules_forward.1} parent=0 // pred_check_branch
    %553 = sbr.rel (0) target = $region17
  $region16: #{capsules_forward.1} parent=0 // pred_region
    _
  $region17: #{capsules_forward.1} parent=0 // pred_fallthru
    _

</llo_original>
